<compile_context>
chip_gen: v7x
topology: tpu7x:2x2x1
jax: 0.10.0
libtpu: 0.0.40
codegen_flags: <defaults>
</compile_context>

<pallas_src>
import jax
import jax.numpy as jnp
from jax.experimental import pallas as pl
from jax.experimental.pallas import tpu as pltpu

EPS = 1e-5
_VMEM_LIMIT = 32 << 20      # scoped VMEM limit: safe on v5e/v6e (128 MiB) & v7x (64 MiB/TC)
_PASS1_BUDGET = 24 << 20    # double-buffered input tile budget, pass 1
_PASS2_BUDGET = 20 << 20    # double-buffered in+out tile budget, pass 2


# -------- pass 1: per-(image, tile) partial channel sums + Gram matrix -------
def _stats_kernel(x_ref, s_ref, g_ref):
    # x_ref: (1, Cin, thw); s_ref: (1, 1, Cin, 1); g_ref: (1, 1, Cin, Cin)
    x = x_ref[0].astype(jnp.float32)                        # f32 accumulation
    s_ref[0, 0] = jnp.sum(x, axis=1, keepdims=True)         # lane reduce (XLU)
    # Gram matrix via MXU (NT contraction over the lane axis)
    g_ref[0, 0] = jax.lax.dot_general(
        x, x, (((1,), (1,)), ((), ())), preferred_element_type=jnp.float32)


# -------- pass 2: fused BN1 + 1x1 conv + BN2 = single affine matmul ----------
def _fused_kernel(x_ref, w_ref, b_ref, o_ref):
    # x_ref: (1, Cin, thw); w_ref: (Cout, Cin); b_ref: (Cout, 1)
    x = x_ref[0]                                            # (Cin, thw), native dtype
    y = jnp.dot(w_ref[...], x, preferred_element_type=jnp.float32) + b_ref[...]
    o_ref[0] = y.astype(o_ref.dtype)


def _round_up(x, m):
    return (x + m - 1) // m * m


def _choose_tile(hw, per_lane_bytes, budget_bytes):
    """Largest multiple of 128 that divides hw and keeps the per-lane buffer
    bytes (double-buffer factor already included by caller) inside budget."""
    cap = max(128, (budget_bytes // max(per_lane_bytes, 1)) // 128 * 128)
    t = min(hw, cap)
    while hw % t != 0:
        t -= 128
    return max(t, 128)


# ------------------------------- wrapper -------------------------------------
def linear_reduction(x_nchw, params):
    N, Cin, H, W = x_nchw.shape
    Cout = params["conv_w"].shape[0]
    HW = H * W
    M = N * HW
    x_dtype = x_nchw.dtype
    x_bytes = jnp.dtype(x_dtype).itemsize

    # Free view to (N, Cin, HW); stream native dtype (no f32 upcast in HBM).
    x = x_nchw.reshape(N, Cin, HW)
    HWp = _round_up(HW, 128)
    if HWp != HW:
        # lane-align: zeros don't perturb sums/Gram and are sliced off at the end
        x = jnp.pad(x, ((0, 0), (0, 0), (0, HWp - HW)))

    # ---- per-pass tile sizes ----
    thw1 = _choose_tile(HWp, 2 * Cin * x_bytes, _PASS1_BUDGET)
    thw2 = _choose_tile(HWp, 2 * (Cin + Cout) * x_bytes, _PASS2_BUDGET)
    grid1 = HWp // thw1
    grid2 = HWp // thw2

    # ---- pass 1: partial channel sums + Gram matrices (per image, per tile) ----
    s_part, g_part = pl.pallas_call(
        _stats_kernel,
        out_shape=(jax.ShapeDtypeStruct((N, grid1, Cin, 1), jnp.float32),
                   jax.ShapeDtypeStruct((N, grid1, Cin, Cin), jnp.float32)),
        grid=(N, grid1),
        in_specs=[pl.BlockSpec((1, Cin, thw1), lambda n, j: (n, 0, j))],
        out_specs=(pl.BlockSpec((1, 1, Cin, 1), lambda n, j: (n, j, 0, 0)),
                   pl.BlockSpec((1, 1, Cin, Cin), lambda n, j: (n, j, 0, 0))),
        compiler_params=pltpu.CompilerParams(
            dimension_semantics=("parallel", "parallel"),
            vmem_limit_bytes=_VMEM_LIMIT),
    )(x)

    s = jnp.sum(s_part, axis=(0, 1))[:, 0]                  # (Cin,)
    G = jnp.sum(g_part, axis=(0, 1))                        # (Cin, Cin)

    # ---- fold BN1 (training-mode batch stats) into the 1x1 conv ----
    mean1 = s / M
    var1 = jnp.maximum(jnp.diag(G) / M - mean1 * mean1, 0.0)   # biased, clamped
    a1 = params["bn1_gamma"] / jnp.sqrt(var1 + EPS)
    d1 = params["bn1_beta"] - mean1 * a1
    w = params["conv_w"].reshape(Cout, Cin).astype(jnp.float32)
    w_eff = w * a1[None, :]                                 # (Cout, Cin)
    b_eff = params["conv_b"].astype(jnp.float32) + w @ d1   # (Cout,)

    # ---- BN2 statistics derived analytically (conv output never materialized) ----
    t = w_eff @ s                                           # (Cout,)
    ysum = t + M * b_eff
    q = jnp.einsum("oc,cd,od->o", w_eff, G, w_eff)          # diag(W G W^T)
    ysumsq = q + 2.0 * b_eff * t + M * b_eff * b_eff
    mean2 = ysum / M
    var2 = jnp.maximum(ysumsq / M - mean2 * mean2, 0.0)
    a2 = params["bn2_gamma"] / jnp.sqrt(var2 + EPS)
    d2 = params["bn2_beta"] - mean2 * a2

    # Final affine: weights cast to the streamed dtype (bf16 MXU if x is bf16),
    # bias kept f32 (added to the f32 matmul accumulator).
    w_fin = (a2[:, None] * w_eff).astype(x_dtype)           # (Cout, Cin)
    b_fin = (a2 * b_eff + d2).reshape(Cout, 1).astype(jnp.float32)

    # ---- pass 2: single fused affine matmul over channels ----
    out = pl.pallas_call(
        _fused_kernel,
        out_shape=jax.ShapeDtypeStruct((N, Cout, HWp), x_dtype),
        grid=(N, grid2),
        in_specs=[pl.BlockSpec((1, Cin, thw2), lambda n, j: (n, 0, j)),
                  pl.BlockSpec((Cout, Cin), lambda n, j: (0, 0)),
                  pl.BlockSpec((Cout, 1), lambda n, j: (0, 0))],
        out_specs=pl.BlockSpec((1, Cout, thw2), lambda n, j: (n, 0, j)),
        compiler_params=pltpu.CompilerParams(
            dimension_semantics=("parallel", "parallel"),
            vmem_limit_bytes=_VMEM_LIMIT),
    )(x, w_fin, b_fin)

    if HWp != HW:
        out = out[:, :, :HW]
    return out.reshape(N, Cout, H, W)                       # free view back to NCHW


# ---------------- pure-JAX reference (for correctness check) -----------------
def reference(x, params):
    def bn(v, gamma, beta):
        mean = v.mean(axis=(0, 2, 3), keepdims=True)
        var = v.var(axis=(0, 2, 3), keepdims=True)          # biased
        return (v - mean) / jnp.sqrt(var + EPS) * gamma[None, :, None, None] \
               + beta[None, :, None, None]

    h = bn(x, params["bn1_gamma"], params["bn1_beta"])
    Cout, Cin = params["conv_w"].shape[:2]
    y = jnp.einsum("nchw,oc->nohw", h, params["conv_w"].reshape(Cout, Cin))
    y = y + params["conv_b"][None, :, None, None]
    return bn(y, params["bn2_gamma"], params["bn2_beta"])


if __name__ == "__main__":
    key = jax.random.PRNGKey(0)
    N, Cin, H, W = 2, 4, 16, 16
    reduce_dim = 8  # stand-in for int(sys.argv[-1]) in the original script

    k_x, k_w, k_b, k_g1, k_b1, k_g2, k_b2 = jax.random.split(key, 7)
    x = jax.random.normal(k_x, (N, Cin, H, W), dtype=jnp.float32)

    bound = 1.0 / jnp.sqrt(jnp.float32(Cin))  # PyTorch Conv2d default init range
    params = {
        "conv_w": jax.random.uniform(k_w, (reduce_dim, Cin, 1, 1),
                                     minval=-bound, maxval=bound,
                                     dtype=jnp.float32),
        "conv_b": jax.random.uniform(k_b, (reduce_dim,),
                                     minval=-bound, maxval=bound,
                                     dtype=jnp.float32),
        "bn1_gamma": 1.0 + 0.1 * jax.random.normal(k_g1, (Cin,), jnp.float32),
        "bn1_beta": 0.1 * jax.random.normal(k_b1, (Cin,), jnp.float32),
        "bn2_gamma": 1.0 + 0.1 * jax.random.normal(k_g2, (reduce_dim,), jnp.float32),
        "bn2_beta": 0.1 * jax.random.normal(k_b2, (reduce_dim,), jnp.float32),
    }

    out = linear_reduction(x, params)
    out = jax.block_until_ready(out)

    ref = reference(x, params)
    assert out.shape == (N, reduce_dim, H, W)
    assert jnp.allclose(out, ref, rtol=1e-4, atol=1e-4), \
        float(jnp.max(jnp.abs(out - ref)))

    print("KERNEL_OK")
</pallas_src>

<mosaic_0001>
module attributes {stable_mosaic.version = 11 : i64} {
  func.func @_stats_kernel(%arg0: i32, %arg1: i32, %arg2: memref<1x4x256xf32, #tpu.memory_space<vmem>>, %arg3: memref<1x1x4x1xf32, #tpu.memory_space<vmem>>, %arg4: memref<1x1x4x4xf32, #tpu.memory_space<vmem>>) attributes {dimension_semantics = [#tpu.dimension_semantics<parallel>, #tpu.dimension_semantics<parallel>], iteration_bounds = array<i64: 2, 1>, scalar_prefetch = 0 : i64, scratch_operands = 0 : i64, tpu.core_type = #tpu.core_type<tc>, window_params = [{transform_indices = @transform_0, window_bounds = array<i64: 1, 4, 256>}, {transform_indices = @transform_1, window_bounds = array<i64: 1, 1, 4, 1>}, {transform_indices = @transform_2, window_bounds = array<i64: 1, 1, 4, 4>}]} {
    %c0 = arith.constant 0 : index
    %c0_0 = arith.constant 0 : index
    %c0_1 = arith.constant 0 : index
    %0 = vector.load %arg2[%c0, %c0_0, %c0_1] : memref<1x4x256xf32, #tpu.memory_space<vmem>>, vector<1x4x256xf32>
    %1 = vector.shape_cast %0 : vector<1x4x256xf32> to vector<4x256xf32>
    %cst = arith.constant dense<0.000000e+00> : vector<4xf32>
    %2 = vector.multi_reduction <add>, %1, %cst [1] : vector<4x256xf32> to vector<4xf32>
    %3 = vector.shape_cast %2 : vector<4xf32> to vector<4x1xf32>
    %c0_2 = arith.constant 0 : index
    %c0_3 = arith.constant 0 : index
    %c0_4 = arith.constant 0 : index
    %c0_5 = arith.constant 0 : index
    %4 = vector.load %arg3[%c0_2, %c0_3, %c0_4, %c0_5] : memref<1x1x4x1xf32, #tpu.memory_space<vmem>>, vector<1x1x4x1xf32>
    %5 = vector.shape_cast %4 : vector<1x1x4x1xf32> to vector<4x1xf32>
    %6 = vector.shape_cast %3 : vector<4x1xf32> to vector<1x1x4x1xf32>
    tpu.vector_store %arg3[%c0_2, %c0_3, %c0_4, %c0_5], %6 {strides = array<i32>} : memref<1x1x4x1xf32, #tpu.memory_space<vmem>>, vector<1x1x4x1xf32>,
    %cst_6 = arith.constant dense<0.000000e+00> : vector<4x4xf32>
    %7 = tpu.matmul %1, %1, %cst_6 {dimension_numbers = #tpu.dot_dimension_numbers<[1], [1], [0], [0], [0, 0, 1, 0], [], []>} : vector<4x256xf32>, vector<4x256xf32>, vector<4x4xf32> -> vector<4x4xf32>
    %c0_7 = arith.constant 0 : index
    %c0_8 = arith.constant 0 : index
    %c0_9 = arith.constant 0 : index
    %c0_10 = arith.constant 0 : index
    %8 = vector.load %arg4[%c0_7, %c0_8, %c0_9, %c0_10] : memref<1x1x4x4xf32, #tpu.memory_space<vmem>>, vector<1x1x4x4xf32>
    %9 = vector.shape_cast %8 : vector<1x1x4x4xf32> to vector<4x4xf32>
    %10 = vector.shape_cast %7 : vector<4x4xf32> to vector<1x1x4x4xf32>
    tpu.vector_store %arg4[%c0_7, %c0_8, %c0_9, %c0_10], %10 {strides = array<i32>} : memref<1x1x4x4xf32, #tpu.memory_space<vmem>>, vector<1x1x4x4xf32>,
    return
  }
  func.func @transform_0(%arg0: i32, %arg1: i32) -> (i32, i32, i32) {
    %c0_i32 = arith.constant 0 : i32
    %c0_i32_0 = arith.constant 0 : i32
    return %arg0, %c0_i32, %arg1 : i32, i32, i32
  }
  func.func @transform_1(%arg0: i32, %arg1: i32) -> (i32, i32, i32, i32) {
    %c0_i32 = arith.constant 0 : i32
    %c0_i32_0 = arith.constant 0 : i32
    %c0_i32_1 = arith.constant 0 : i32
    return %arg0, %arg1, %c0_i32, %c0_i32_0 : i32, i32, i32, i32
  }
  func.func @transform_2(%arg0: i32, %arg1: i32) -> (i32, i32, i32, i32) {
    %c0_i32 = arith.constant 0 : i32
    %c0_i32_0 = arith.constant 0 : i32
    %c0_i32_1 = arith.constant 0 : i32
    return %arg0, %arg1, %c0_i32, %c0_i32_0 : i32, i32, i32, i32
  }
}

</mosaic_0001>

<llo_original>
// kernel: tpu_custom_call.1
$region0: #{tpu_custom_call.1}
  #allocation0 [shape = 'u32[]', space=smem, size = 0x4, offset = 0x4, fixed_abs, tag = 'smem constant byte address 0x4 - core index']
  #allocation1 [shape = 'u32[144,128]{1,0:T(1,128)}', space=vmem, size = 0x12000, scoped, tag = 'internal scratch']
  %s0 = inlined_call_operand.hbm [shape: f32[2,4,256], index: 0, kind: input, shape index: {}]
  %s1 = inlined_call_operand.vmem [shape: f32[2,1,4,1], index: 1, kind: output, shape index: {0}]
  %s2 = inlined_call_operand.hbm [shape: f32[2,1,4,4], index: 2, kind: output, shape index: {1}]
  %3 = xla_tuple %s1, %s2
  %s4 = sld [smem:[#allocation0]]
  $region49: #{tpu_custom_call.1} parent=0
    _
  %s6 = ssub.s32 1, %s4
  %s7 = scalar_select 0, %s6, %s4
  $region1: #{tpu_custom_call.1} parent=0
    #allocation2 [shape = 'u8[8192]{0}', space=vmem, size = 0x2000, scoped, tag = 'input window, operand 0']
    #allocation3 [shape = 's32[2]{0}', space=sflag, size = 0x8, scoped, tag = 'scoped memory for tpu_custom_call.1']
    #allocation4 [shape = 's32[2]{0}', space=sflag, size = 0x8, scoped, tag = 'scoped memory for tpu_custom_call.1']
    #allocation5 [shape = 'u8[4096]{0}', space=vmem, size = 0x1000, scoped, tag = 'output window, operand 1']
    %8 = vsyncpa [#allocation3], 0
    %s9 = scalar_lea.sflag [#allocation3], 1
    %10 = vsyncpa %s9, 0
    %11 = vsyncpa [#allocation4], 0
    %s12 = scalar_lea.sflag [#allocation4], 1
    %13 = vsyncpa %s12, 0
    loop: start=0, step=1, limit=4
    $region2: #{tpu_custom_call.1} parent=1 // loop_pre_header
      _
    $region3: #{tpu_custom_call.1} parent=1 // loop_header
      %s15 = sphi 0, %s19
      %p16 = scmp.ge.s32.totalorder %s15, 4
      %s22 = sphi 0, %s34
      %s23 = sphi 0, %s30
      %s24 = sphi 0, %s22
      %s25 = sphi 0, %s23
      %s26 = sphi 0, %s24
      %s27 = sphi 0, %s25
      %s39 = sphi 0, %s41
      %s42 = sphi 0, %s39
      %s43 = sphi 0, %s42
      %s59 = sphi 0, %s43
      %s67 = sphi 0, %s69
      %s70 = sphi 0, %s67
      %s71 = sphi 0, %s70
      %s87 = sphi 0, %s71
      %s95 = sphi 0, %s97
      %s98 = sphi 0, %s95
      %s99 = sphi 0, %s98
      %s115 = sphi 0, %s99
    $region4: #{tpu_custom_call.1} parent=1 // loop_header_branch
      %18 = sbr.rel (%p16) target = $region8
    $region5: #{tpu_custom_call.1} parent=1 // loop_body
      %s20 = ssub.s32 %s15, 1
      %s21 = ssub.s32 %s15, 2
      %s28 = sadd.s32 1, %s23
      %p29 = scmp.ge.s32.totalorder %s28, 1
      %s30 = scalar_select %p29, 0, %s28
      %s31 = sadd.s32 1, %s22
      %s32 = scalar_select %p29, %s31, %s22
      %p33 = scmp.ge.s32.totalorder %s32, 2
      %s34 = scalar_select %p33, 0, %s32
      %s35 = ssub.s32 %s22, %s34
      %s36 = ssub.s32 %s23, %s30
      %s37 = sor.u32 %s35, %s36
      %p38 = scmp.eq.s32.totalorder %s37, 0
      %s40 = sadd.s32 %s39, 1
      %s41 = scalar_select %p38, %s39, %s40
      %p44 = pneg %p38
      %p45 = scmp.eq.s32.totalorder %s15, 1
      %p46 = por %p44, %p45
      %p47 = scmp.ne.s32.totalorder %s39, %s42
      %p48 = scmp.eq.s32.totalorder %s15, 0
      %p49 = por %p47, %p48
      %p50 = scmp.ne.s32.totalorder %s39, %s42
      %p51 = scmp.eq.s32.totalorder %s20, 1
      %p52 = por %p50, %p51
      %p53 = scmp.ne.s32.totalorder %s42, %s43
      %p54 = scmp.eq.s32.totalorder %s20, 0
      %p55 = por %p53, %p54
      %p56 = scmp.ne.s32.totalorder %s42, %s43
      %p57 = scmp.eq.s32.totalorder %s21, 1
      %p58 = por %p56, %p57
      %p60 = scmp.ne.s32.totalorder %s43, %s59
      %p61 = scmp.eq.s32.totalorder %s21, 0
      %p62 = por %p60, %p61
      %s63 = ssub.s32 %s22, %s34
      %s64 = ssub.s32 %s23, %s30
      %s65 = sor.u32 %s63, %s64
      %p66 = scmp.eq.s32.totalorder %s65, 0
      %s68 = sadd.s32 %s67, 1
      %s69 = scalar_select %p66, %s67, %s68
      %p72 = pneg %p66
      %p73 = scmp.eq.s32.totalorder %s15, 1
      %p74 = por %p72, %p73
      %p75 = scmp.ne.s32.totalorder %s67, %s70
      %p76 = scmp.eq.s32.totalorder %s15, 0
      %p77 = por %p75, %p76
      %p78 = scmp.ne.s32.totalorder %s67, %s70
      %p79 = scmp.eq.s32.totalorder %s20, 1
      %p80 = por %p78, %p79
      %p81 = scmp.ne.s32.totalorder %s70, %s71
      %p82 = scmp.eq.s32.totalorder %s20, 0
      %p83 = por %p81, %p82
      %p84 = scmp.ne.s32.totalorder %s70, %s71
      %p85 = scmp.eq.s32.totalorder %s21, 1
      %p86 = por %p84, %p85
      %p88 = scmp.ne.s32.totalorder %s71, %s87
      %p89 = scmp.eq.s32.totalorder %s21, 0
      %p90 = por %p88, %p89
      %s91 = ssub.s32 %s22, %s34
      %s92 = ssub.s32 %s23, %s30
      %s93 = sor.u32 %s91, %s92
      %p94 = scmp.eq.s32.totalorder %s93, 0
      %s96 = sadd.s32 %s95, 1
      %s97 = scalar_select %p94, %s95, %s96
      %p100 = pneg %p94
      %p101 = scmp.eq.s32.totalorder %s15, 1
      %p102 = por %p100, %p101
      %p103 = scmp.ne.s32.totalorder %s95, %s98
      %p104 = scmp.eq.s32.totalorder %s15, 0
      %p105 = por %p103, %p104
      %p106 = scmp.ne.s32.totalorder %s95, %s98
      %p107 = scmp.eq.s32.totalorder %s20, 1
      %p108 = por %p106, %p107
      %p109 = scmp.ne.s32.totalorder %s98, %s99
      %p110 = scmp.eq.s32.totalorder %s20, 0
      %p111 = por %p109, %p110
      %p112 = scmp.ne.s32.totalorder %s98, %s99
      %p113 = scmp.eq.s32.totalorder %s21, 1
      %p114 = por %p112, %p113
      %p116 = scmp.ne.s32.totalorder %s99, %s115
      %p117 = scmp.eq.s32.totalorder %s21, 0
      %p118 = por %p116, %p117
      %p119 = scmp.le.s32.totalorder 1, %s15
      %p120 = scmp.lt.s32.totalorder %s15, 3
      %p121 = pnand %p119, %p120
      %p122 = pneg %p121
      // Predicated region
      $region9: #{tpu_custom_call.1} parent=5 // pred_check
        _
      $region10: #{tpu_custom_call.1} parent=5 // pred_check_branch
        %124 = sbr.rel (%p121) target = $region12
      $region11: #{tpu_custom_call.1} parent=5 // pred_region
        %s125 = ssub.s32 %s15, 1
      $region12: #{tpu_custom_call.1} parent=5 // pred_fallthru
        _
      %p126 = scmp.lt.s32.totalorder %s15, 2
      // Predicated region
      $region13: #{tpu_custom_call.1} parent=5 // pred_check
        %p127 = pneg %p126
      $region14: #{tpu_custom_call.1} parent=5 // pred_check_branch
        %129 = sbr.rel (%p127) target = $region16
      $region15: #{tpu_custom_call.1} parent=5 // pred_region
        // Predicated region
        $region17: #{tpu_custom_call.1} parent=15 // pred_check
          %p130 = pneg %p49
        $region18: #{tpu_custom_call.1} parent=15 // pred_check_branch
          %132 = sbr.rel (%p130) target = $region20
        $region19: #{tpu_custom_call.1} parent=15 // pred_region
          %s133 = sand.u32 %s39, 1
          %s134 = scalar_lea.sflag [#allocation3], %s133
          %s135 = sand.u32 %s39, 1
          %s136 = smul.addr %s135, 8
          %s137 = scalar_lea.vmem [#allocation2], %s136
          %s138 = smul.u32 2, %s23
          %s140 = ssub.s32 128, 128
          %141 = vsyncadd %s134, %s140
          %s142 = smul.addr %s22, 2
          %s143 = sadd.s32 %s138, %s142
          %s144 = smul.addr %s143, 64
          %s145 = scalar_lea.hbm %s0, %s144
          %s147 = sshll.u32 %s137, 4
          %s148 = int_to_ptr.vmem [resolvable:$true] %s147
          %150 = dma.hbm_to_vmem [thread:$0]  %s145, 128, %s148, %s134
        $region20: #{tpu_custom_call.1} parent=15 // pred_fallthru
          _
      $region16: #{tpu_custom_call.1} parent=5 // pred_fallthru
        _
      %p151 = scmp.le.s32.totalorder 1, %s15
      %p152 = scmp.lt.s32.totalorder %s15, 3
      %p153 = pnand %p151, %p152
      %p154 = pneg %p153
      // Predicated region
      $region21: #{tpu_custom_call.1} parent=5 // pred_check
        _
      $region22: #{tpu_custom_call.1} parent=5 // pred_check_branch
        %156 = sbr.rel (%p153) target = $region24
      $region23: #{tpu_custom_call.1} parent=5 // pred_region
        %s157 = ssub.s32 %s15, 1
        %s158 = sand.u32 %s42, 1
        %s159 = scalar_lea.sflag [#allocation3], %s158
        %s160 = sand.u32 %s42, 1
        %s161 = smul.addr %s160, 8
        %s162 = scalar_lea.vmem [#allocation2], %s161
        // Predicated region
        $region25: #{tpu_custom_call.1} parent=23 // pred_check
          %p163 = pneg %p55
        $region26: #{tpu_custom_call.1} parent=23 // pred_check_branch
          %165 = sbr.rel (%p163) target = $region28
        $region27: #{tpu_custom_call.1} parent=23 // pred_region
          %166 = dma.done %s159, 128
        $region28: #{tpu_custom_call.1} parent=23 // pred_fallthru
          _
        %s167 = sand.u32 %s42, 1
        %s168 = scalar_lea.sflag [#allocation3], %s167
        %s169 = sand.u32 %s42, 1
        %s170 = smul.addr %s169, 8
        %s171 = scalar_lea.vmem [#allocation2], %s170
        %p172 = pneg %p55
        %p173 = pneg %p52
        %p174 = pneg %p83
        %p175 = pneg %p80
        %p176 = scmp.lt.s32.totalorder %s24, 1
        %s177 = scalar_select %p176, %s24, 1
        %p178 = scmp.lt.s32.totalorder %s25, 0
        %s179 = scalar_select %p178, %s25, 0
        %s180 = sadd.s32 %s179, %s177
        %s181 = smul.addr %s180, 4
        %s182 = scalar_lea.vmem %s1, %s181
        %p183 = pneg %p111
        %p184 = pneg %p108
        %s185 = sand.u32 %s98, 1
        %s186 = scalar_lea.sflag [#allocation4], %s185
        %s187 = sand.u32 %s98, 1
        %s188 = smul.addr %s187, 4
        %s189 = scalar_lea.vmem [#allocation5], %s188
        %s190 = smul.u32 2, %s25
        %p191 = scmp.lt.s32.totalorder %s24, 1
        %s192 = scalar_select %p191, %s24, 1
        %p193 = scmp.lt.s32.totalorder %s25, 0
        %s194 = scalar_select %p193, %s25, 0
        %s195 = sadd.s32 %s194, %s192
        %s196 = smul.addr %s195, 4
        %s197 = scalar_lea.vmem %s1, %s196
        %v198 = vld [vmem:[%s162] sm:$0xff]
        %v200 = vcombine.high %v198, %v198
        %vm202 = vcmask 1043456
        %v203 = vsel %vm202, %v198, 0.0
        %v204 = vsel %vm202, %v200, 0.0
        %v205 = vadd.f32 %v203, %v204
        %206 = vadd.xlane.f32.xlu0 %v205
        %v207 = vpop.xlane.xlu0 %206
        %vm208 = vcmask 3072
        %209 = vst.msk [vmem:[%s197] sm:$0xf] %vm208, %v207
        %210 = vmatprep.subr.mxu0 %v200
        %211 = vmatpush1.xpose.msra.mxu0 %v198
        %212 = vmatprep.subr.mxu0 0.0
        %213 = vmatpush1.xpose.msra.mxu0 0.0
        %214 = vmatprep.subr.mxu0 0.0
        %215 = vmatpush1.xpose.msra.mxu0 0.0
        %216 = vmatprep.subr.mxu0 0.0
        %217 = vmatpush1.xpose.msra.mxu0 0.0
        %218 = vmatprep.subr.mxu0 0.0
        %219 = vmatpush1.xpose.msra.mxu0 0.0
        %220 = vmatprep.subr.mxu0 0.0
        %221 = vmatpush1.xpose.msra.mxu0 0.0
        %222 = vmatprep.subr.mxu0 0.0
        %223 = vmatpush1.xpose.msra.mxu0 0.0
        %224 = vmatprep.subr.mxu0 0.0
        %225 = vmatpush1.xpose.msra.mxu0 0.0
        %226 = vmatprep.subr.mxu0 0.0
        %227 = vmatpush1.xpose.msra.mxu0 0.0
        %228 = vmatprep.subr.mxu0 0.0
        %229 = vmatpush1.xpose.msra.mxu0 0.0
        %230 = vmatprep.subr.mxu0 0.0
        %231 = vmatpush1.xpose.msra.mxu0 0.0
        %232 = vmatprep.subr.mxu0 0.0
        %233 = vmatpush1.xpose.msra.mxu0 0.0
        %234 = vmatprep.subr.mxu0 0.0
        %235 = vmatpush1.xpose.msra.mxu0 0.0
        %236 = vmatprep.subr.mxu0 0.0
        %237 = vmatpush1.xpose.msra.mxu0 0.0
        %238 = vmatprep.subr.mxu0 0.0
        %239 = vmatpush1.xpose.msra.mxu0 0.0
        %240 = vmatprep.subr.mxu0 0.0
        %241 = vmatpush1.xpose.msra.mxu0 0.0
        %242 = vmatprep.subr.mxu0 0.0
        %243 = vmatpush1.xpose.msra.mxu0 0.0
        %244 = vmatprep.subr.mxu0 0.0
        %245 = vmatpush1.xpose.msra.mxu0 0.0
        %246 = vmatprep.subr.mxu0 0.0
        %247 = vmatpush1.xpose.msra.mxu0 0.0
        %248 = vmatprep.subr.mxu0 0.0
        %249 = vmatpush1.xpose.msra.mxu0 0.0
        %250 = vmatprep.subr.mxu0 0.0
        %251 = vmatpush1.xpose.msra.mxu0 0.0
        %252 = vmatprep.subr.mxu0 0.0
        %253 = vmatpush1.xpose.msra.mxu0 0.0
        %254 = vmatprep.subr.mxu0 0.0
        %255 = vmatpush1.xpose.msra.mxu0 0.0
        %256 = vmatprep.subr.mxu0 0.0
        %257 = vmatpush1.xpose.msra.mxu0 0.0
        %258 = vmatprep.subr.mxu0 0.0
        %259 = vmatpush1.xpose.msra.mxu0 0.0
        %260 = vmatprep.subr.mxu0 0.0
        %261 = vmatpush1.xpose.msra.mxu0 0.0
        %262 = vmatprep.subr.mxu0 0.0
        %263 = vmatpush1.xpose.msra.mxu0 0.0
        %264 = vmatprep.subr.mxu0 0.0
        %265 = vmatpush1.xpose.msra.mxu0 0.0
        %266 = vmatprep.subr.mxu0 0.0
        %267 = vmatpush1.xpose.msra.mxu0 0.0
        %268 = vmatprep.subr.mxu0 0.0
        %269 = vmatpush1.xpose.msra.mxu0 0.0
        %270 = vmatprep.subr.mxu0 0.0
        %271 = vmatpush1.xpose.msra.mxu0 0.0
        %272 = vmatprep.subr.mxu0 0.0
        %273 = vmatpush1.xpose.msra.mxu0 0.0
        %274 = vmatprep.mubr.f32.mxu0 %v200
        %275 = vmatmul.mubr.f32.gmra.mrb[0].mxu0 %v198
        %v276 = vpop.f32.mrb[0].mxu0
        %v277 = vadd.f32 0.0, %v276
        %v278 = vpop.f32.mrb[0].mxu0
        %279 = vdwg.mxu0
        %vm280 = vcmask 27648
        %281 = vst.msk [vmem:[%s189] sm:$0xf] %vm280, %v277
        %p282 = scmp.lt.s32.totalorder %s24, 1
        %s283 = scalar_select %p282, %s24, 1
        %p284 = scmp.lt.s32.totalorder %s25, 0
        %s285 = scalar_select %p284, %s25, 0
        %s286 = sadd.s32 %s285, %s283
        %s287 = smul.addr %s286, 4
        %s288 = scalar_lea.vmem %s1, %s287
        %s289 = sand.u32 %s98, 1
        %s290 = scalar_lea.sflag [#allocation4], %s289
        %s291 = sand.u32 %s98, 1
        %s292 = smul.addr %s291, 4
        %s293 = scalar_lea.vmem [#allocation5], %s292
        // Predicated region
        $region29: #{tpu_custom_call.1} parent=23 // pred_check
          %p294 = pneg %p80
        $region30: #{tpu_custom_call.1} parent=23 // pred_check_branch
          %296 = sbr.rel (%p294) target = $region32
        $region31: #{tpu_custom_call.1} parent=23 // pred_region
          _
        $region32: #{tpu_custom_call.1} parent=23 // pred_fallthru
          _
        // Predicated region
        $region33: #{tpu_custom_call.1} parent=23 // pred_check
          %p297 = pneg %p108
        $region34: #{tpu_custom_call.1} parent=23 // pred_check_branch
          %299 = sbr.rel (%p297) target = $region36
        $region35: #{tpu_custom_call.1} parent=23 // pred_region
          %s301 = ssub.s32 64, 64
          %302 = vsyncadd %s290, %s301
          %s303 = sadd.s32 %s25, %s24
          %s304 = smul.addr %s303, 64
          %s305 = scalar_lea.hbm %s2, %s304
          %s307 = sshll.u32 %s293, 4
          %s308 = int_to_ptr.vmem [resolvable:$true] %s307
          %310 = dma.vmem_to_hbm [thread:$0]  %s308, 64, %s305, %s290
        $region36: #{tpu_custom_call.1} parent=23 // pred_fallthru
          _
      $region24: #{tpu_custom_call.1} parent=5 // pred_fallthru
        _
      %p311 = scmp.le.s32.totalorder 2, %s15
      // Predicated region
      $region37: #{tpu_custom_call.1} parent=5 // pred_check
        %p312 = pneg %p311
      $region38: #{tpu_custom_call.1} parent=5 // pred_check_branch
        %314 = sbr.rel (%p312) target = $region40
      $region39: #{tpu_custom_call.1} parent=5 // pred_region
        %s315 = ssub.s32 %s15, 2
        // Predicated region
        $region41: #{tpu_custom_call.1} parent=39 // pred_check
          %p316 = pneg %p86
        $region42: #{tpu_custom_call.1} parent=39 // pred_check_branch
          %318 = sbr.rel (%p316) target = $region44
        $region43: #{tpu_custom_call.1} parent=39 // pred_region
          %p319 = scmp.lt.s32.totalorder %s26, 1
          %s320 = scalar_select %p319, %s26, 1
          %p321 = scmp.lt.s32.totalorder %s27, 0
          %s322 = scalar_select %p321, %s27, 0
          %s323 = sadd.s32 %s322, %s320
          %s324 = smul.addr %s323, 4
          %s325 = scalar_lea.vmem %s1, %s324
        $region44: #{tpu_custom_call.1} parent=39 // pred_fallthru
          _
        // Predicated region
        $region45: #{tpu_custom_call.1} parent=39 // pred_check
          %p326 = pneg %p114
        $region46: #{tpu_custom_call.1} parent=39 // pred_check_branch
          %328 = sbr.rel (%p326) target = $region48
        $region47: #{tpu_custom_call.1} parent=39 // pred_region
          %s329 = sand.u32 %s99, 1
          %s330 = scalar_lea.sflag [#allocation4], %s329
          %s331 = sand.u32 %s99, 1
          %s332 = smul.addr %s331, 4
          %s333 = scalar_lea.vmem [#allocation5], %s332
          %334 = dma.done %s330, 64
        $region48: #{tpu_custom_call.1} parent=39 // pred_fallthru
          _
      $region40: #{tpu_custom_call.1} parent=5 // pred_fallthru
        _
    $region6: #{tpu_custom_call.1} parent=1 // loop_footer
      %s19 = sadd.s32 1, %s15
    $region7: #{tpu_custom_call.1} parent=1 // loop_footer_branch
      %14 = sbr.rel target = $region3
    $region8: #{tpu_custom_call.1} parent=1 // loop_exit
      _
    %335 = vsyncpa [#allocation3], 1
    %s336 = scalar_lea.sflag [#allocation3], 1
    %337 = vsyncpa %s336, 1
    %338 = vsyncpa [#allocation4], 1
    %s339 = scalar_lea.sflag [#allocation4], 1
    %340 = vsyncpa %s339, 1

</llo_original>
